<compile_context>
chip_gen: v7x
topology: tpu7x:2x2x1
jax: 0.10.0
libtpu: 0.0.40
codegen_flags: <defaults>
</compile_context>

<pallas_src>
import functools
import math

import jax
import jax.numpy as jnp
from jax.experimental import pallas as pl
from jax.experimental.pallas import tpu as pltpu


def _round_up(n, m):
    return ((n + m - 1) // m) * m


def _fused_mlp_kernel(*refs, n_layers: int, batch_norm: bool, inv_batch: float):
    """Fused [Linear -> (BatchNorm1d train-mode) -> ReLU] * n_layers.

    refs = (x_ref, w_0, ..., w_{n-1}, affine_ref, o_ref)
      x_ref   : bf16 [B, D0_pad]
      w_i     : bf16 [Din_pad_i, Dout_pad_i]   (pre-transposed: x @ W)
      affine  : f32  [2*n_layers, Dmax_pad] (gamma/beta rows) if batch_norm
                f32  [n_layers,   Dmax_pad] (bias rows)       otherwise
      o_ref   : f32  [B, Dlast_pad]
    The activation stays resident in VMEM/vregs across layers (no HBM round trips).
    """
    x_ref = refs[0]
    w_refs = refs[1:1 + n_layers]
    affine_ref = refs[1 + n_layers]
    o_ref = refs[-1]

    h = x_ref[...]                                           # bf16 [B, D0_pad]
    for i in range(n_layers):                                # static unroll (few layers)
        w = w_refs[i][...]                                   # bf16 [Din_pad, Dout_pad]
        dout_p = w.shape[1]
        # bf16 x bf16 MXU matmul, f32 accumulation.
        y = jnp.dot(h, w, preferred_element_type=jnp.float32)   # f32 [B, Dout_pad]
        if batch_norm:
            # nn.BatchNorm1d training-mode forward, eps=1e-5, all post-matmul math
            # in f32 (v5e VPU/EUP have no bf16).  Linear bias omitted (cancelled by
            # the batch-mean subtraction).  Single-pass stats: sum & sum-of-squares,
            # one precomputed 1/B multiply (var = E[y^2] - E[y]^2).
            gamma = affine_ref[2 * i:2 * i + 1, :dout_p]     # f32 [1, Dout_pad]
            beta = affine_ref[2 * i + 1:2 * i + 2, :dout_p]  # f32 [1, Dout_pad]
            s = jnp.sum(y, axis=0, keepdims=True)
            ss = jnp.sum(y * y, axis=0, keepdims=True)
            mean = s * inv_batch
            var = ss * inv_batch - mean * mean
            y = (y - mean) * jax.lax.rsqrt(var + 1e-5) * gamma + beta
        else:
            b = affine_ref[i:i + 1, :dout_p]                 # f32 [1, Dout_pad]
            y = y + b
        y = jnp.maximum(y, 0.0)                              # ReLU
        # TODO(synk): training-mode Dropout (dropout_rates > 0) not implemented;
        # with dropout_rates == 0 (this config) PyTorch applies no dropout.
        h = y.astype(jnp.bfloat16) if i < n_layers - 1 else y

    o_ref[...] = h.astype(o_ref.dtype)


def init_mlp_params(key, input_dim, hidden_units):
    """Matches MlpUnitLayer._init_weight_: xavier_normal_ on the linear weight,
    zeros on bias, BN gamma=1 / beta=0.  Weights returned as [in, out]."""
    params = []
    dims = [input_dim] + list(hidden_units)
    for i in range(len(hidden_units)):
        d_in, d_out = dims[i], dims[i + 1]
        key, sub = jax.random.split(key)
        std = math.sqrt(2.0 / (d_in + d_out))                # xavier normal, gain=1
        # PyTorch weight is [out, in]; store transposed [in, out] for x @ W.
        w = (std * jax.random.normal(sub, (d_out, d_in), jnp.float32)).T
        params.append({
            "w": w,
            "b": jnp.zeros((d_out,), jnp.float32),
            "gamma": jnp.ones((d_out,), jnp.float32),
            "beta": jnp.zeros((d_out,), jnp.float32),
        })
    return params


def prepare_params(params, *, batch_norm: bool):
    """ONE-TIME parameter prep (do this at init, not per forward call):
    zero-pad feature dims to the 128-lane width, cast weights to bf16, and stack
    all per-layer affine vectors into a single f32 array.

    Padding is inert: padded W rows/cols are 0 and padded beta/bias columns are 0,
    so padded activation columns stay exactly 0 through matmul + BN + ReLU.
    """
    n_layers = len(params)
    dims_in = [p["w"].shape[0] for p in params]
    dims_out = [p["w"].shape[1] for p in params]
    din_pads = [_round_up(d, 128) for d in dims_in]
    dout_pads = [_round_up(d, 128) for d in dims_out]
    dmax = max(dout_pads)

    weights = []
    for i, p in enumerate(params):
        w_pad = jnp.zeros((din_pads[i], dout_pads[i]), jnp.bfloat16)
        w_pad = w_pad.at[:dims_in[i], :dims_out[i]].set(p["w"].astype(jnp.bfloat16))
        weights.append(w_pad)

    if batch_norm:
        affine = jnp.zeros((2 * n_layers, dmax), jnp.float32)
        for i, p in enumerate(params):
            affine = affine.at[2 * i, :dims_out[i]].set(p["gamma"])
            affine = affine.at[2 * i + 1, :dims_out[i]].set(p["beta"])
    else:
        affine = jnp.zeros((n_layers, dmax), jnp.float32)
        for i, p in enumerate(params):
            affine = affine.at[i, :dims_out[i]].set(p["b"])
    return weights, affine


@functools.partial(jax.jit, static_argnames=("batch_norm", "out_dim"))
def mlp_forward(x, weights, affine, *, batch_norm: bool, out_dim: int):
    """MlpLayer.forward as one fused Pallas kernel (jitted).  Only the input
    pad/cast is built per call; all parameter prep happens in prepare_params()."""
    n_layers = len(weights)
    B, d_in = x.shape
    d0_pad = weights[0].shape[0]
    dlast_pad = weights[-1].shape[1]

    # NOTE: the batch axis is NOT padded — zero rows would corrupt training-mode
    # BN statistics.  Prefer B a multiple of 8 (16 for bf16 packing) at call site.
    if d_in == d0_pad:
        x_pad = x.astype(jnp.bfloat16)
    else:
        x_pad = jnp.zeros((B, d0_pad), jnp.bfloat16).at[:, :d_in].set(
            x.astype(jnp.bfloat16))

    vmem = pl.BlockSpec(memory_space=pltpu.MemorySpace.VMEM)
    kernel = functools.partial(
        _fused_mlp_kernel,
        n_layers=n_layers, batch_norm=batch_norm, inv_batch=1.0 / B)

    out_pad = pl.pallas_call(
        kernel,
        out_shape=jax.ShapeDtypeStruct((B, dlast_pad), jnp.float32),
        in_specs=[vmem] * (n_layers + 2),
        out_specs=vmem,
        compiler_params=pltpu.CompilerParams(
            # Explicit limit; safe on v7x's 64 MiB physical VMEM. Re-derive if the
            # weights grow / streaming is added.
            vmem_limit_bytes=32 * 1024 * 1024),
    )(x_pad, *weights, affine)
    return out_pad[:, :out_dim]


def _reference_forward(x, params, *, batch_norm: bool):
    """Pure-JAX f32 reference matching the PyTorch module (train-mode BN)."""
    h = x
    for p in params:
        y = h @ p["w"] + p["b"]
        if batch_norm:
            mean = jnp.mean(y, axis=0, keepdims=True)
            var = jnp.mean((y - mean) ** 2, axis=0, keepdims=True)
            y = (y - mean) * jax.lax.rsqrt(var + 1e-5) * p["gamma"] + p["beta"]
        h = jnp.maximum(y, 0.0)
    return h


if __name__ == "__main__":
    key = jax.random.PRNGKey(0)

    batch = 8                      # multiple of 8 -> clean sublane packing
    input_dim = 32
    hidden_units = (64, 128)
    dropout_rates = 0.0            # no dropout -> deterministic forward

    key, xkey = jax.random.split(key)
    x = jax.random.normal(xkey, (batch, input_dim), jnp.float32)
    params = init_mlp_params(key, input_dim, hidden_units)

    # One-time parameter prep (padding + bf16 cast) — hoisted out of the hot path.
    w_bn, aff_bn = prepare_params(params, batch_norm=True)
    w_nb, aff_nb = prepare_params(params, batch_norm=False)

    # batch_norm=True path (Linear -> BN -> ReLU per layer, fused).
    out_bn = jax.block_until_ready(
        mlp_forward(x, w_bn, aff_bn, batch_norm=True, out_dim=hidden_units[-1]))
    assert out_bn.shape == (batch, hidden_units[-1])
    assert bool(jnp.all(out_bn >= 0.0))                       # ReLU non-negative
    ref_bn = _reference_forward(x, params, batch_norm=True)
    assert bool(jnp.all(jnp.abs(out_bn - ref_bn) <= 0.1 + 0.1 * jnp.abs(ref_bn)))

    # batch_norm=False path (Linear -> ReLU per layer).
    out_plain = jax.block_until_ready(
        mlp_forward(x, w_nb, aff_nb, batch_norm=False, out_dim=hidden_units[-1]))
    assert out_plain.shape == (batch, hidden_units[-1])
    assert bool(jnp.all(out_plain >= 0.0))
    ref_plain = _reference_forward(x, params, batch_norm=False)
    assert bool(jnp.all(jnp.abs(out_plain - ref_plain)
                        <= 0.1 + 0.1 * jnp.abs(ref_plain)))

    print("KERNEL_OK")
</pallas_src>

<mosaic_0001>
module attributes {stable_mosaic.version = 11 : i64} {
  func.func @_fused_mlp_kernel(%arg0: memref<8x128xbf16, #tpu.memory_space<vmem>>, %arg1: memref<128x128xbf16, #tpu.memory_space<vmem>>, %arg2: memref<128x128xbf16, #tpu.memory_space<vmem>>, %arg3: memref<4x128xf32, #tpu.memory_space<vmem>>, %arg4: memref<8x128xf32, #tpu.memory_space<vmem>>) attributes {dimension_semantics = [], scalar_prefetch = 0 : i64, scratch_operands = 0 : i64, tpu.core_type = #tpu.core_type<tc>} {
    %c0 = arith.constant 0 : index
    %c0_0 = arith.constant 0 : index
    %0 = vector.load %arg0[%c0, %c0_0] : memref<8x128xbf16, #tpu.memory_space<vmem>>, vector<8x128xbf16>
    %c0_1 = arith.constant 0 : index
    %c0_2 = arith.constant 0 : index
    %1 = vector.load %arg1[%c0_1, %c0_2] : memref<128x128xbf16, #tpu.memory_space<vmem>>, vector<128x128xbf16>
    %cst = arith.constant dense<0.000000e+00> : vector<8x128xf32>
    %2 = tpu.matmul %0, %1, %cst {dimension_numbers = #tpu.dot_dimension_numbers<[1], [0], [0], [1], [0, 0, 1, 1], [], []>} : vector<8x128xbf16>, vector<128x128xbf16>, vector<8x128xf32> -> vector<8x128xf32>
    %c0_3 = arith.constant 0 : index
    %c0_4 = arith.constant 0 : index
    %3 = vector.load %arg3[%c0_3, %c0_4] : memref<4x128xf32, #tpu.memory_space<vmem>>, vector<1x128xf32>
    %c1 = arith.constant 1 : index
    %c0_5 = arith.constant 0 : index
    %4 = vector.load %arg3[%c1, %c0_5] : memref<4x128xf32, #tpu.memory_space<vmem>>, vector<1x128xf32>
    %cst_6 = arith.constant dense<0.000000e+00> : vector<128xf32>
    %5 = vector.multi_reduction <add>, %2, %cst_6 [0] : vector<8x128xf32> to vector<128xf32>
    %6 = vector.shape_cast %5 : vector<128xf32> to vector<1x128xf32>
    %7 = arith.mulf %2, %2 : vector<8x128xf32>
    %cst_7 = arith.constant dense<0.000000e+00> : vector<128xf32>
    %8 = vector.multi_reduction <add>, %7, %cst_7 [0] : vector<8x128xf32> to vector<128xf32>
    %9 = vector.shape_cast %8 : vector<128xf32> to vector<1x128xf32>
    %cst_8 = arith.constant 1.250000e-01 : f32
    %10 = vector.broadcast %cst_8 : f32 to vector<1x128xf32>
    %11 = arith.mulf %6, %10 : vector<1x128xf32>
    %cst_9 = arith.constant 1.250000e-01 : f32
    %12 = vector.broadcast %cst_9 : f32 to vector<1x128xf32>
    %13 = arith.mulf %9, %12 : vector<1x128xf32>
    %14 = arith.mulf %11, %11 : vector<1x128xf32>
    %15 = arith.subf %13, %14 : vector<1x128xf32>
    %16 = vector.broadcast %11 : vector<1x128xf32> to vector<8x128xf32>
    %17 = arith.subf %2, %16 : vector<8x128xf32>
    %cst_10 = arith.constant 9.99999974E-6 : f32
    %18 = vector.broadcast %cst_10 : f32 to vector<1x128xf32>
    %19 = arith.addf %15, %18 : vector<1x128xf32>
    %20 = math.rsqrt %19 : vector<1x128xf32>
    %21 = vector.broadcast %20 : vector<1x128xf32> to vector<8x128xf32>
    %22 = arith.mulf %17, %21 : vector<8x128xf32>
    %23 = vector.broadcast %3 : vector<1x128xf32> to vector<8x128xf32>
    %24 = arith.mulf %22, %23 : vector<8x128xf32>
    %25 = vector.broadcast %4 : vector<1x128xf32> to vector<8x128xf32>
    %26 = arith.addf %24, %25 : vector<8x128xf32>
    %cst_11 = arith.constant 0.000000e+00 : f32
    %27 = vector.broadcast %cst_11 : f32 to vector<8x128xf32>
    %28 = arith.maximumf %26, %27 : vector<8x128xf32>
    %29 = arith.truncf %28 : vector<8x128xf32> to vector<8x128xbf16>
    %c0_12 = arith.constant 0 : index
    %c0_13 = arith.constant 0 : index
    %30 = vector.load %arg2[%c0_12, %c0_13] : memref<128x128xbf16, #tpu.memory_space<vmem>>, vector<128x128xbf16>
    %cst_14 = arith.constant dense<0.000000e+00> : vector<8x128xf32>
    %31 = tpu.matmul %29, %30, %cst_14 {dimension_numbers = #tpu.dot_dimension_numbers<[1], [0], [0], [1], [0, 0, 1, 1], [], []>} : vector<8x128xbf16>, vector<128x128xbf16>, vector<8x128xf32> -> vector<8x128xf32>
    %c2 = arith.constant 2 : index
    %c0_15 = arith.constant 0 : index
    %32 = vector.load %arg3[%c2, %c0_15] : memref<4x128xf32, #tpu.memory_space<vmem>>, vector<1x128xf32>
    %c3 = arith.constant 3 : index
    %c0_16 = arith.constant 0 : index
    %33 = vector.load %arg3[%c3, %c0_16] : memref<4x128xf32, #tpu.memory_space<vmem>>, vector<1x128xf32>
    %cst_17 = arith.constant dense<0.000000e+00> : vector<128xf32>
    %34 = vector.multi_reduction <add>, %31, %cst_17 [0] : vector<8x128xf32> to vector<128xf32>
    %35 = vector.shape_cast %34 : vector<128xf32> to vector<1x128xf32>
    %36 = arith.mulf %31, %31 : vector<8x128xf32>
    %cst_18 = arith.constant dense<0.000000e+00> : vector<128xf32>
    %37 = vector.multi_reduction <add>, %36, %cst_18 [0] : vector<8x128xf32> to vector<128xf32>
    %38 = vector.shape_cast %37 : vector<128xf32> to vector<1x128xf32>
    %cst_19 = arith.constant 1.250000e-01 : f32
    %39 = vector.broadcast %cst_19 : f32 to vector<1x128xf32>
    %40 = arith.mulf %35, %39 : vector<1x128xf32>
    %cst_20 = arith.constant 1.250000e-01 : f32
    %41 = vector.broadcast %cst_20 : f32 to vector<1x128xf32>
    %42 = arith.mulf %38, %41 : vector<1x128xf32>
    %43 = arith.mulf %40, %40 : vector<1x128xf32>
    %44 = arith.subf %42, %43 : vector<1x128xf32>
    %45 = vector.broadcast %40 : vector<1x128xf32> to vector<8x128xf32>
    %46 = arith.subf %31, %45 : vector<8x128xf32>
    %cst_21 = arith.constant 9.99999974E-6 : f32
    %47 = vector.broadcast %cst_21 : f32 to vector<1x128xf32>
    %48 = arith.addf %44, %47 : vector<1x128xf32>
    %49 = math.rsqrt %48 : vector<1x128xf32>
    %50 = vector.broadcast %49 : vector<1x128xf32> to vector<8x128xf32>
    %51 = arith.mulf %46, %50 : vector<8x128xf32>
    %52 = vector.broadcast %32 : vector<1x128xf32> to vector<8x128xf32>
    %53 = arith.mulf %51, %52 : vector<8x128xf32>
    %54 = vector.broadcast %33 : vector<1x128xf32> to vector<8x128xf32>
    %55 = arith.addf %53, %54 : vector<8x128xf32>
    %cst_22 = arith.constant 0.000000e+00 : f32
    %56 = vector.broadcast %cst_22 : f32 to vector<8x128xf32>
    %57 = arith.maximumf %55, %56 : vector<8x128xf32>
    %c0_23 = arith.constant 0 : index
    %c0_24 = arith.constant 0 : index
    %58 = vector.load %arg4[%c0_23, %c0_24] : memref<8x128xf32, #tpu.memory_space<vmem>>, vector<8x128xf32>
    tpu.vector_store %arg4[%c0_23, %c0_24], %57 {strides = array<i32>} : memref<8x128xf32, #tpu.memory_space<vmem>>, vector<8x128xf32>,
    return
  }
}

</mosaic_0001>

<llo_original>
// kernel: mlp_forward.1
$region0: #{mlp_forward.1}
  #allocation0 [shape = 'u32[]', space=smem, size = 0x4, offset = 0x4, fixed_abs, tag = 'smem constant byte address 0x4 - core index']
  #allocation1 [shape = 'u32[144,128]{1,0:T(1,128)}', space=vmem, size = 0x12000, scoped, tag = 'internal scratch']
  %s0 = inlined_call_operand.vmem [shape: bf16[8,128], index: 0, kind: input, shape index: {}]
  %s1 = inlined_call_operand.hbm [shape: bf16[128,128], index: 1, kind: input, shape index: {}]
  %s2 = inlined_call_operand.hbm [shape: bf16[128,128], index: 2, kind: input, shape index: {}]
  %s3 = inlined_call_operand.vmem [shape: f32[4,128], index: 3, kind: input, shape index: {}]
  %s4 = inlined_call_operand.hbm [shape: f32[8,128], index: 4, kind: output, shape index: {}]
  %s5 = sld [smem:[#allocation0]]
  $region34: #{mlp_forward.1} parent=0
    _
  %s7 = ssub.s32 1, %s5
  %s8 = scalar_select 0, %s7, %s5
  $region1: #{mlp_forward.1} parent=0
    #allocation2 [shape = 'u8[32768]{0}', space=vmem, size = 0x8000, scoped, tag = 'input window, operand 1, single buffered']
    #allocation3 [shape = 's32[1]{0}', space=sflag, size = 0x4, scoped, tag = 'scoped memory for mlp_forward.1']
    #allocation4 [shape = 's32[1]{0}', space=sflag, size = 0x4, scoped, tag = 'scoped memory for mlp_forward.1']
    #allocation5 [shape = 'u8[32768]{0}', space=vmem, size = 0x8000, scoped, tag = 'input window, operand 2, single buffered']
    #allocation6 [shape = 's32[1]{0}', space=sflag, size = 0x4, scoped, tag = 'scoped memory for mlp_forward.1']
    #allocation7 [shape = 'u8[4096]{0}', space=vmem, size = 0x1000, scoped, tag = 'output window, operand 0, single buffered']
    %9 = vsyncpa [#allocation3], 0
    %10 = vsyncpa [#allocation6], 0
    %11 = vsyncpa [#allocation4], 0
    // Predicated region
    $region2: #{mlp_forward.1} parent=1 // pred_check
      _
    $region3: #{mlp_forward.1} parent=1 // pred_check_branch
      %13 = sbr.rel (0) target = $region5
    $region4: #{mlp_forward.1} parent=1 // pred_region
      _
    $region5: #{mlp_forward.1} parent=1 // pred_fallthru
      _
    // Predicated region
    $region6: #{mlp_forward.1} parent=1 // pred_check
      _
    $region7: #{mlp_forward.1} parent=1 // pred_check_branch
      %15 = sbr.rel (0) target = $region9
    $region8: #{mlp_forward.1} parent=1 // pred_region
      %s17 = ssub.s32 1024, 1024
      %18 = vsyncadd [#allocation3], %s17
      %s19 = sshll.u32 [#allocation2], 4
      %s20 = int_to_ptr.vmem [resolvable:$true] %s19
      %25 = dma.hbm_to_vmem [thread:$0]  %s1, 1024, %s20, [#allocation3], 64, 64, 4
    $region9: #{mlp_forward.1} parent=1 // pred_fallthru
      _
    // Predicated region
    $region10: #{mlp_forward.1} parent=1 // pred_check
      _
    $region11: #{mlp_forward.1} parent=1 // pred_check_branch
      %27 = sbr.rel (0) target = $region13
    $region12: #{mlp_forward.1} parent=1 // pred_region
      %s29 = ssub.s32 1024, 1024
      %30 = vsyncadd [#allocation6], %s29
      %s31 = sshll.u32 [#allocation5], 4
      %s32 = int_to_ptr.vmem [resolvable:$true] %s31
      %37 = dma.hbm_to_vmem [thread:$0]  %s2, 1024, %s32, [#allocation6], 64, 64, 4
    $region13: #{mlp_forward.1} parent=1 // pred_fallthru
      _
    // Predicated region
    $region14: #{mlp_forward.1} parent=1 // pred_check
      _
    $region15: #{mlp_forward.1} parent=1 // pred_check_branch
      %39 = sbr.rel (0) target = $region17
    $region16: #{mlp_forward.1} parent=1 // pred_region
      _
    $region17: #{mlp_forward.1} parent=1 // pred_fallthru
      _
    // Predicated region
    $region18: #{mlp_forward.1} parent=1 // pred_check
      _
    $region19: #{mlp_forward.1} parent=1 // pred_check_branch
      %41 = sbr.rel (0) target = $region21
    $region20: #{mlp_forward.1} parent=1 // pred_region
      %42 = dma.done [#allocation3], 1024
    $region21: #{mlp_forward.1} parent=1 // pred_fallthru
      _
    // Predicated region
    $region22: #{mlp_forward.1} parent=1 // pred_check
      _
    $region23: #{mlp_forward.1} parent=1 // pred_check_branch
      %44 = sbr.rel (0) target = $region25
    $region24: #{mlp_forward.1} parent=1 // pred_region
      %45 = dma.done [#allocation6], 1024
    $region25: #{mlp_forward.1} parent=1 // pred_fallthru
      _
    %v47 = vld [vmem:[%s0] sm:$0xf]
    %v48 = vld [vmem:[#allocation2] sm:$0xf]
    %v49 = vld [vmem:[#allocation2 + $0x4] sm:$0xf]
    %v50 = vld [vmem:[#allocation2 + $0x8] sm:$0xf]
    %v51 = vld [vmem:[#allocation2 + $0xc] sm:$0xf]
    %v52 = vld [vmem:[#allocation2 + $0x10] sm:$0xf]
    %v53 = vld [vmem:[#allocation2 + $0x14] sm:$0xf]
    %v54 = vld [vmem:[#allocation2 + $0x18] sm:$0xf]
    %v55 = vld [vmem:[#allocation2 + $0x1c] sm:$0xf]
    %v56 = vld [vmem:[#allocation2 + $0x20] sm:$0xf]
    %v57 = vld [vmem:[#allocation2 + $0x24] sm:$0xf]
    %v58 = vld [vmem:[#allocation2 + $0x28] sm:$0xf]
    %v59 = vld [vmem:[#allocation2 + $0x2c] sm:$0xf]
    %v60 = vld [vmem:[#allocation2 + $0x30] sm:$0xf]
    %v61 = vld [vmem:[#allocation2 + $0x34] sm:$0xf]
    %v62 = vld [vmem:[#allocation2 + $0x38] sm:$0xf]
    %v63 = vld [vmem:[#allocation2 + $0x3c] sm:$0xf]
    %v80 = vunpack.c.l.b16 %v48
    %v81 = vunpack.c.l.b16 %v49
    %v82 = vunpack.c.l.b16 %v50
    %v83 = vunpack.c.l.b16 %v51
    %v84 = vunpack.c.l.b16 %v52
    %v85 = vunpack.c.l.b16 %v53
    %v86 = vunpack.c.l.b16 %v54
    %v87 = vunpack.c.l.b16 %v55
    %v88 = vunpack.c.l.b16 %v56
    %v89 = vunpack.c.l.b16 %v57
    %v90 = vunpack.c.l.b16 %v58
    %v91 = vunpack.c.l.b16 %v59
    %v92 = vunpack.c.l.b16 %v60
    %v93 = vunpack.c.l.b16 %v61
    %v94 = vunpack.c.l.b16 %v62
    %v95 = vunpack.c.l.b16 %v63
    %v96 = vpack.c.b16 %v81, %v80
    %v97 = vpack.c.b16 %v83, %v82
    %v98 = vpack.c.b16 %v85, %v84
    %v99 = vpack.c.b16 %v87, %v86
    %v100 = vpack.c.b16 %v89, %v88
    %v101 = vpack.c.b16 %v91, %v90
    %v102 = vpack.c.b16 %v93, %v92
    %v103 = vpack.c.b16 %v95, %v94
    %112 = vmatprep.subr.bf16.mxu0 0
    %113 = vmatpush1.bf16.msra.mxu0 %v96
    %114 = vmatprep.subr.bf16.mxu0 0
    %115 = vmatpush1.bf16.msra.mxu0 %v97
    %116 = vmatprep.subr.bf16.mxu0 0
    %117 = vmatpush1.bf16.msra.mxu0 %v98
    %118 = vmatprep.subr.bf16.mxu0 0
    %119 = vmatpush1.bf16.msra.mxu0 %v99
    %120 = vmatprep.subr.bf16.mxu0 0
    %121 = vmatpush1.bf16.msra.mxu0 %v100
    %122 = vmatprep.subr.bf16.mxu0 0
    %123 = vmatpush1.bf16.msra.mxu0 %v101
    %124 = vmatprep.subr.bf16.mxu0 0
    %125 = vmatpush1.bf16.msra.mxu0 %v102
    %126 = vmatprep.subr.bf16.mxu0 0
    %127 = vmatpush1.bf16.msra.mxu0 %v103
    %128 = vmatprep.subr.bf16.mxu0 0
    %129 = vmatpush1.bf16.msra.mxu0 0
    %130 = vmatprep.subr.bf16.mxu0 0
    %131 = vmatpush1.bf16.msra.mxu0 0
    %132 = vmatprep.subr.bf16.mxu0 0
    %133 = vmatpush1.bf16.msra.mxu0 0
    %134 = vmatprep.subr.bf16.mxu0 0
    %135 = vmatpush1.bf16.msra.mxu0 0
    %136 = vmatprep.subr.bf16.mxu0 0
    %137 = vmatpush1.bf16.msra.mxu0 0
    %138 = vmatprep.subr.bf16.mxu0 0
    %139 = vmatpush1.bf16.msra.mxu0 0
    %140 = vmatprep.subr.bf16.mxu0 0
    %141 = vmatpush1.bf16.msra.mxu0 0
    %142 = vmatprep.subr.bf16.mxu0 0
    %143 = vmatpush1.bf16.msra.mxu0 0
    %144 = vmatprep.mubr.bf16.mxu0 0
    %145 = vmatmul.mubr.bf16.gmra.mrb[0].mxu0 %v47
    %v146 = vpop.f32.mrb[0].mxu0
    %v147 = vadd.f32 0.0, %v146
    %v148 = vpop.f32.mrb[0].mxu0
    %v149 = vpop.f32.mrb[0].mxu0
    %v150 = vpop.f32.mrb[0].mxu0
    %151 = vdwg.mxu0
    %v152 = vld [vmem:[%s3] sm:$0x1]
    %v153 = vld [vmem:[%s3 + $0x1] sm:$0x1]
    %v154 = vrot.slane %v147, 4
    %v155 = vadd.f32 %v147, %v154
    %v156 = vrot.slane %v155, 2
    %v157 = vadd.f32 %v155, %v156
    %v158 = vrot.slane %v157, 1
    %v159 = vadd.f32 %v157, %v158
    %v160 = vmul.f32 %v147, %v147
    %v161 = vrot.slane %v160, 4
    %v162 = vadd.f32 %v160, %v161
    %v163 = vrot.slane %v162, 2
    %v164 = vadd.f32 %v162, %v163
    %v165 = vrot.slane %v164, 1
    %v166 = vadd.f32 %v164, %v165
    %v167 = vmul.f32 %v159, 0.125
    %v168 = vmul.f32 %v166, 0.125
    %v169 = vmul.f32 %v167, %v167
    %v170 = vsub.f32 %v168, %v169
    %v171 = vsub.f32 %v147, %v167
    %v172 = vadd.f32 %v170, 1e-05
    %v173 = vrsqrt.pop %v172
    %v174 = vmul.f32 %v171, %v173
    %v175 = vlaneseq
    %v176 = vshrl.u32 %v175, 7
    %v177 = vsub.s32 0, %v176
    %v178 = vrot.slane %v152, %v177
    %v179 = vmul.f32 %v174, %v178
    %v180 = vlaneseq
    %v181 = vshrl.u32 %v180, 7
    %v182 = vsub.s32 0, %v181
    %v183 = vrot.slane %v153, %v182
    %v184 = vadd.f32 %v179, %v183
    %v185 = vmax.f32 %v184, 0.0
    %v186 = vpack.c.bf16 %v185, %v185
    %v187 = vld [vmem:[#allocation5] sm:$0xf]
    %v188 = vld [vmem:[#allocation5 + $0x4] sm:$0xf]
    %v189 = vld [vmem:[#allocation5 + $0x8] sm:$0xf]
    %v190 = vld [vmem:[#allocation5 + $0xc] sm:$0xf]
    %v191 = vld [vmem:[#allocation5 + $0x10] sm:$0xf]
    %v192 = vld [vmem:[#allocation5 + $0x14] sm:$0xf]
    %v193 = vld [vmem:[#allocation5 + $0x18] sm:$0xf]
    %v194 = vld [vmem:[#allocation5 + $0x1c] sm:$0xf]
    %v195 = vld [vmem:[#allocation5 + $0x20] sm:$0xf]
    %v196 = vld [vmem:[#allocation5 + $0x24] sm:$0xf]
    %v197 = vld [vmem:[#allocation5 + $0x28] sm:$0xf]
    %v198 = vld [vmem:[#allocation5 + $0x2c] sm:$0xf]
    %v199 = vld [vmem:[#allocation5 + $0x30] sm:$0xf]
    %v200 = vld [vmem:[#allocation5 + $0x34] sm:$0xf]
    %v201 = vld [vmem:[#allocation5 + $0x38] sm:$0xf]
    %v202 = vld [vmem:[#allocation5 + $0x3c] sm:$0xf]
    %v219 = vunpack.c.l.b16 %v187
    %v220 = vunpack.c.l.b16 %v188
    %v221 = vunpack.c.l.b16 %v189
    %v222 = vunpack.c.l.b16 %v190
    %v223 = vunpack.c.l.b16 %v191
    %v224 = vunpack.c.l.b16 %v192
    %v225 = vunpack.c.l.b16 %v193
    %v226 = vunpack.c.l.b16 %v194
    %v227 = vunpack.c.l.b16 %v195
    %v228 = vunpack.c.l.b16 %v196
    %v229 = vunpack.c.l.b16 %v197
    %v230 = vunpack.c.l.b16 %v198
    %v231 = vunpack.c.l.b16 %v199
    %v232 = vunpack.c.l.b16 %v200
    %v233 = vunpack.c.l.b16 %v201
    %v234 = vunpack.c.l.b16 %v202
    %v235 = vpack.c.b16 %v220, %v219
    %v236 = vpack.c.b16 %v222, %v221
    %v237 = vpack.c.b16 %v224, %v223
    %v238 = vpack.c.b16 %v226, %v225
    %v239 = vpack.c.b16 %v228, %v227
    %v240 = vpack.c.b16 %v230, %v229
    %v241 = vpack.c.b16 %v232, %v231
    %v242 = vpack.c.b16 %v234, %v233
    %251 = vmatprep.subr.bf16.mxu0 0
    %252 = vmatpush1.bf16.msra.mxu0 %v235
    %253 = vmatprep.subr.bf16.mxu0 0
    %254 = vmatpush1.bf16.msra.mxu0 %v236
    %255 = vmatprep.subr.bf16.mxu0 0
    %256 = vmatpush1.bf16.msra.mxu0 %v237
    %257 = vmatprep.subr.bf16.mxu0 0
    %258 = vmatpush1.bf16.msra.mxu0 %v238
    %259 = vmatprep.subr.bf16.mxu0 0
    %260 = vmatpush1.bf16.msra.mxu0 %v239
    %261 = vmatprep.subr.bf16.mxu0 0
    %262 = vmatpush1.bf16.msra.mxu0 %v240
    %263 = vmatprep.subr.bf16.mxu0 0
    %264 = vmatpush1.bf16.msra.mxu0 %v241
    %265 = vmatprep.subr.bf16.mxu0 0
    %266 = vmatpush1.bf16.msra.mxu0 %v242
    %267 = vmatprep.subr.bf16.mxu0 0
    %268 = vmatpush1.bf16.msra.mxu0 0
    %269 = vmatprep.subr.bf16.mxu0 0
    %270 = vmatpush1.bf16.msra.mxu0 0
    %271 = vmatprep.subr.bf16.mxu0 0
    %272 = vmatpush1.bf16.msra.mxu0 0
    %273 = vmatprep.subr.bf16.mxu0 0
    %274 = vmatpush1.bf16.msra.mxu0 0
    %275 = vmatprep.subr.bf16.mxu0 0
    %276 = vmatpush1.bf16.msra.mxu0 0
    %277 = vmatprep.subr.bf16.mxu0 0
    %278 = vmatpush1.bf16.msra.mxu0 0
    %279 = vmatprep.subr.bf16.mxu0 0
    %280 = vmatpush1.bf16.msra.mxu0 0
    %281 = vmatprep.subr.bf16.mxu0 0
    %282 = vmatpush1.bf16.msra.mxu0 0
    %283 = vmatprep.mubr.bf16.mxu0 0
    %284 = vmatmul.mubr.bf16.gmra.mrb[0].mxu0 %v186
    %v285 = vpop.f32.mrb[0].mxu0
    %v286 = vadd.f32 0.0, %v285
    %v287 = vpop.f32.mrb[0].mxu0
    %v288 = vpop.f32.mrb[0].mxu0
    %v289 = vpop.f32.mrb[0].mxu0
    %290 = vdwg.mxu0
    %v291 = vld [vmem:[%s3 + $0x2] sm:$0x1]
    %v292 = vld [vmem:[%s3 + $0x3] sm:$0x1]
    %v293 = vrot.slane %v286, 4
    %v294 = vadd.f32 %v286, %v293
    %v295 = vrot.slane %v294, 2
    %v296 = vadd.f32 %v294, %v295
    %v297 = vrot.slane %v296, 1
    %v298 = vadd.f32 %v296, %v297
    %v299 = vmul.f32 %v286, %v286
    %v300 = vrot.slane %v299, 4
    %v301 = vadd.f32 %v299, %v300
    %v302 = vrot.slane %v301, 2
    %v303 = vadd.f32 %v301, %v302
    %v304 = vrot.slane %v303, 1
    %v305 = vadd.f32 %v303, %v304
    %v306 = vmul.f32 %v298, 0.125
    %v307 = vmul.f32 %v305, 0.125
    %v308 = vmul.f32 %v306, %v306
    %v309 = vsub.f32 %v307, %v308
    %v310 = vsub.f32 %v286, %v306
    %v311 = vadd.f32 %v309, 1e-05
    %v312 = vrsqrt.pop %v311
    %v313 = vmul.f32 %v310, %v312
    %v314 = vlaneseq
    %v315 = vshrl.u32 %v314, 7
    %v316 = vsub.s32 0, %v315
    %v317 = vrot.slane %v291, %v316
    %v318 = vmul.f32 %v313, %v317
    %v319 = vlaneseq
    %v320 = vshrl.u32 %v319, 7
    %v321 = vsub.s32 0, %v320
    %v322 = vrot.slane %v292, %v321
    %v323 = vadd.f32 %v318, %v322
    %v324 = vmax.f32 %v323, 0.0
    %325 = vst [vmem:[#allocation7] sm:$0xff] %v324
    // Predicated region
    $region26: #{mlp_forward.1} parent=1 // pred_check
      _
    $region27: #{mlp_forward.1} parent=1 // pred_check_branch
      %327 = sbr.rel (0) target = $region29
    $region28: #{mlp_forward.1} parent=1 // pred_region
      %s329 = ssub.s32 128, 128
      %330 = vsyncadd [#allocation4], %s329
      %s332 = sshll.u32 [#allocation7], 4
      %s333 = int_to_ptr.vmem [resolvable:$true] %s332
      %335 = dma.vmem_to_hbm [thread:$0]  %s333, 128, %s4, [#allocation4]
    $region29: #{mlp_forward.1} parent=1 // pred_fallthru
      _
    // Predicated region
    $region30: #{mlp_forward.1} parent=1 // pred_check
      _
    $region31: #{mlp_forward.1} parent=1 // pred_check_branch
      %337 = sbr.rel (0) target = $region33
    $region32: #{mlp_forward.1} parent=1 // pred_region
      %338 = dma.done [#allocation4], 128
    $region33: #{mlp_forward.1} parent=1 // pred_fallthru
      _
    %339 = vsyncpa [#allocation3], 1
    %340 = vsyncpa [#allocation6], 1
    %341 = vsyncpa [#allocation4], 1

</llo_original>
